<compile_context>
chip_gen: v7x
topology: tpu7x:2x2x1
jax: 0.10.0
libtpu: 0.0.40
codegen_flags: <defaults>
</compile_context>

<pallas_src>
import functools

import jax
import jax.numpy as jnp
from jax import lax
from jax.experimental import pallas as pl
from jax.experimental.pallas import tpu as pltpu


# ---------------------------------------------------------------------------
# Helpers
# ---------------------------------------------------------------------------
def _round_up(x: int, m: int) -> int:
    return ((x + m - 1) // m) * m


def _cdiv(a: int, b: int) -> int:
    return -(-a // b)


def _tpu_params():
    """(lane_align, vmem_limit_budget_bytes) chosen per TPU generation, conservatively."""
    try:
        kind = jax.devices()[0].device_kind.lower()
    except Exception:
        kind = ""
    vmem_cap = None
    try:
        info = pltpu.get_tpu_info()
        vmem_cap = getattr(info, "vmem_capacity_bytes", None)
    except Exception:
        vmem_cap = None
    if vmem_cap is None:
        # v5e/v6e have 128 MiB VMEM per TensorCore; assume the restrictive 64 MiB (v7x) otherwise.
        vmem_cap = 128 * 1024 * 1024 if ("v5" in kind or "v6" in kind) else 64 * 1024 * 1024
    # Leave headroom for Mosaic internal scratch / semaphores (critical on v7x's 64 MiB).
    vmem_budget = max(vmem_cap - 16 * 1024 * 1024, 16 * 1024 * 1024)
    # v4/v5 MXUs are 128x128 -> 128 lane alignment suffices; v6e/v7x are 2x256x256 -> use 256.
    lane_align = 128 if ("v4" in kind or "v5" in kind) else 256
    return lane_align, vmem_budget


# ---------------------------------------------------------------------------
# Kernels
#   x_ref: (tm, tk) compute_dtype; w_ref: (tn, tk) compute_dtype (PyTorch layout);
#   b_ref: (1, tn) f32; o_ref: (tm, tn).
#   Contraction over dim 1 of BOTH operands == x @ w.T; the MXU takes the transposed RHS
#   natively (verified: no vxpose in the Mosaic dump), so no transpose anywhere.
# ---------------------------------------------------------------------------
def _dot_xt(x, w):
    return lax.dot_general(
        x, w, dimension_numbers=(((1,), (1,)), ((), ())),
        preferred_element_type=jnp.float32,
    )


# --- f32 output: accumulate directly into the VMEM-resident output tile (no scratch) -------------
def _linear_kernel_f32_bias(x_ref, w_ref, b_ref, o_ref):
    k = pl.program_id(2)

    @pl.when(k == 0)
    def _():
        o_ref[...] = jnp.broadcast_to(b_ref[...], o_ref.shape)

    o_ref[...] += _dot_xt(x_ref[...], w_ref[...])


def _linear_kernel_f32_nobias(x_ref, w_ref, o_ref):
    k = pl.program_id(2)

    @pl.when(k == 0)
    def _():
        o_ref[...] = jnp.zeros_like(o_ref)

    o_ref[...] += _dot_xt(x_ref[...], w_ref[...])


# --- narrower output dtypes: f32 scratch accumulator, cast once at writeback ---------------------
def _linear_kernel_acc_bias(x_ref, w_ref, b_ref, o_ref, acc_ref):
    k = pl.program_id(2)

    @pl.when(k == 0)
    def _():
        acc_ref[...] = jnp.broadcast_to(b_ref[...], acc_ref.shape)

    acc_ref[...] += _dot_xt(x_ref[...], w_ref[...])

    @pl.when(k == pl.num_programs(2) - 1)
    def _():
        o_ref[...] = acc_ref[...].astype(o_ref.dtype)


def _linear_kernel_acc_nobias(x_ref, w_ref, o_ref, acc_ref):
    k = pl.program_id(2)

    @pl.when(k == 0)
    def _():
        acc_ref[...] = jnp.zeros_like(acc_ref)

    acc_ref[...] += _dot_xt(x_ref[...], w_ref[...])

    @pl.when(k == pl.num_programs(2) - 1)
    def _():
        o_ref[...] = acc_ref[...].astype(o_ref.dtype)


# ---------------------------------------------------------------------------
# Wrapper
# ---------------------------------------------------------------------------
def my_linear(x, weight, bias=None, *, tm: int = 512, tn: int = 512, tk: int = 512,
              compute_dtype=jnp.bfloat16, force_pallas: bool = False):
    """x: (B, in_features); weight: (out_features, in_features); bias: (out_features,) or None.

    compute_dtype=jnp.bfloat16 (default) runs the MXU fast path with f32 accumulation;
    compute_dtype=jnp.float32 reproduces the reference module's f32 numerics exactly.
    """
    B, K = x.shape
    N, K2 = weight.shape
    assert K == K2, "input_features mismatch"
    out_dtype = x.dtype

    # Tiny-shape fast path: below one MXU tile, launch + pad/slice overhead dominates and a
    # plain XLA dot is strictly faster. The kernel path is identical numerics-wise.
    if not force_pallas and B <= 256 and N <= 256 and K <= 256:
        out = jnp.dot(x.astype(compute_dtype), weight.astype(compute_dtype).T,
                      preferred_element_type=jnp.float32)
        if bias is not None:
            out = out + bias.astype(jnp.float32)
        return out.astype(out_dtype)

    lane_align, vmem_budget = _tpu_params()

    # Balanced tile sizes: split each dim into ceil(dim/target) blocks, then round the block up to
    # the alignment. Minimizes padding waste vs. min(target, round_up(dim, ...)).
    nb_m = _cdiv(B, tm)
    nb_n = _cdiv(N, tn)
    nb_k = _cdiv(K, tk)
    if nb_m == 1 and nb_n == 1 and N > lane_align:
        nb_n = 2  # v7x has 2 TensorCores: make sure a "parallel" axis has >= 2 blocks.
    tm = min(_round_up(_cdiv(B, nb_m), 8), _round_up(B, 8))
    tn = min(_round_up(_cdiv(N, nb_n), lane_align), _round_up(N, lane_align))
    tk = min(_round_up(_cdiv(K, nb_k), lane_align), _round_up(K, lane_align))

    Bp, Kp, Np = _round_up(B, tm), _round_up(K, tk), _round_up(N, tn)
    grid = (Bp // tm, Np // tn, Kp // tk)

    # Cast to the compute dtype and zero-pad to tile multiples (zeros in K contribute nothing;
    # padded B/N rows are sliced off). Lane-dense padded N -> unmasked full-width vector stores.
    # NOTE: under jit these pads/casts fuse; pre-pad the weight at init for a persistent layer.
    xc = x.astype(compute_dtype)
    wc = weight.astype(compute_dtype)
    xp = xc if (Bp, Kp) == (B, K) else jnp.pad(xc, ((0, Bp - B), (0, Kp - K)))
    wp = wc if (Np, Kp) == (N, K) else jnp.pad(wc, ((0, Np - N), (0, Kp - K)))

    x_spec = pl.BlockSpec((tm, tk), lambda i, j, k: (i, k))
    w_spec = pl.BlockSpec((tn, tk), lambda i, j, k: (j, k))
    o_spec = pl.BlockSpec((tm, tn), lambda i, j, k: (i, j))

    in_itemsize = jnp.dtype(compute_dtype).itemsize
    out_itemsize = jnp.dtype(out_dtype).itemsize
    direct_f32 = jnp.dtype(out_dtype) == jnp.dtype(jnp.float32)

    # VMEM working set: double-buffered x/w/bias input tiles + double-buffered output tile
    # (+ f32 scratch accumulator only when the output is narrower than f32).
    vmem_needed = (
        2 * in_itemsize * (tm * tk + tn * tk)
        + (2 * 4 * tn if bias is not None else 0)
        + 2 * out_itemsize * tm * tn
        + (0 if direct_f32 else 4 * tm * tn)
    )
    vmem_limit = int(min(max(vmem_needed + (4 << 20), 16 << 20), vmem_budget))

    compiler_params = pltpu.CompilerParams(
        dimension_semantics=("parallel", "parallel", "arbitrary"),
        vmem_limit_bytes=vmem_limit,
    )

    grid_m, grid_n = grid[0], grid[1]
    cost = pl.CostEstimate(
        flops=2 * Bp * Kp * Np,
        transcendentals=0,
        bytes_accessed=int((xp.size * grid_n + wp.size * grid_m) * in_itemsize
                           + Bp * Np * out_itemsize
                           + (Np * 4 if bias is not None else 0)),
    )

    in_specs = [x_spec, w_spec]
    operands = [xp, wp]
    if bias is not None:
        bp = bias.astype(jnp.float32).reshape(1, N)  # bias stays f32: added inside the accumulator
        if Np != N:
            bp = jnp.pad(bp, ((0, 0), (0, Np - N)))
        in_specs.append(pl.BlockSpec((1, tn), lambda i, j, k: (0, j)))
        operands.append(bp)
        kernel = _linear_kernel_f32_bias if direct_f32 else _linear_kernel_acc_bias
    else:
        kernel = _linear_kernel_f32_nobias if direct_f32 else _linear_kernel_acc_nobias

    scratch_shapes = [] if direct_f32 else [pltpu.VMEM((tm, tn), jnp.float32)]

    out_p = pl.pallas_call(
        kernel,
        out_shape=jax.ShapeDtypeStruct((Bp, Np), out_dtype),
        grid=grid,
        in_specs=in_specs,
        out_specs=o_spec,
        scratch_shapes=scratch_shapes,
        compiler_params=compiler_params,
        cost_estimate=cost,
    )(*operands)

    return out_p[:B, :N] if (Bp, Np) != (B, N) else out_p


# ---------------------------------------------------------------------------
# Self-test
# ---------------------------------------------------------------------------
if __name__ == "__main__":
    key = jax.random.PRNGKey(0)
    kx, kw, kx2, kw2, kb2 = jax.random.split(key, 5)

    # --- Small config consistent with the Lab2 myLinear module ---
    batch, in_features, out_features = 8, 32, 16
    # reset_parameters(): weight ~ U(-0.1, 0.1), bias = 0
    weight = jax.random.uniform(kw, (out_features, in_features), jnp.float32, -0.1, 0.1)
    bias = jnp.zeros((out_features,), jnp.float32)
    x = jax.random.normal(kx, (batch, in_features), jnp.float32)

    # Exact-f32 path through the Pallas kernel (matches module semantics).
    f32_fn = jax.jit(functools.partial(my_linear, compute_dtype=jnp.float32, force_pallas=True))
    out = jax.block_until_ready(f32_fn(x, weight, bias))
    ref = x @ weight.T + bias
    assert out.shape == (batch, out_features)
    assert jnp.allclose(out, ref, atol=1e-5, rtol=1e-5), "f32 bias path mismatch vs reference"

    out_nb = jax.block_until_ready(f32_fn(x, weight, None))
    assert jnp.allclose(out_nb, x @ weight.T, atol=1e-5, rtol=1e-5), "f32 no-bias path mismatch"

    # --- Larger shape: bf16 MXU fast path, multi-block grid, padding exercised ---
    B2, K2, N2 = 192, 384, 272
    x2 = jax.random.normal(kx2, (B2, K2), jnp.float32)
    w2 = jax.random.uniform(kw2, (N2, K2), jnp.float32, -0.1, 0.1)
    b2 = jax.random.normal(kb2, (N2,), jnp.float32) * 0.01
    bf16_fn = jax.jit(functools.partial(my_linear, force_pallas=True))
    out2 = jax.block_until_ready(bf16_fn(x2, w2, b2))
    ref2_bf16 = jnp.dot(x2.astype(jnp.bfloat16), w2.astype(jnp.bfloat16).T,
                        preferred_element_type=jnp.float32) + b2
    ref2_f32 = x2 @ w2.T + b2
    assert out2.shape == (B2, N2)
    assert jnp.allclose(out2, ref2_bf16, atol=2e-3, rtol=2e-3), "bf16 path mismatch vs bf16 ref"
    assert jnp.allclose(out2, ref2_f32, atol=5e-2, rtol=5e-2), "bf16 path too far from f32 ref"

    out2_nb = jax.block_until_ready(bf16_fn(x2, w2, None))
    ref2_nb = jnp.dot(x2.astype(jnp.bfloat16), w2.astype(jnp.bfloat16).T,
                      preferred_element_type=jnp.float32)
    assert jnp.allclose(out2_nb, ref2_nb, atol=2e-3, rtol=2e-3), "bf16 no-bias mismatch"

    # Tiny-shape auto fast path (jnp.dot dispatch) still matches.
    out_fast = jax.block_until_ready(my_linear(x, weight, bias, compute_dtype=jnp.float32))
    assert jnp.allclose(out_fast, ref, atol=1e-5, rtol=1e-5), "fast-path mismatch"

    # TODO(synk): custom backward (myLinearFunction.backward) not implemented — forward pass only.
    print("KERNEL_OK")
</pallas_src>

<mosaic_0001>
module attributes {stable_mosaic.version = 11 : i64} {
  func.func @_linear_kernel_f32_bias(%arg0: i32, %arg1: i32, %arg2: i32, %arg3: memref<8x256xf32, #tpu.memory_space<vmem>>, %arg4: memref<256x256xf32, #tpu.memory_space<vmem>>, %arg5: memref<1x256xf32, #tpu.memory_space<vmem>>, %arg6: memref<8x256xf32, #tpu.memory_space<vmem>>) attributes {dimension_semantics = [#tpu.dimension_semantics<parallel>, #tpu.dimension_semantics<parallel>, #tpu.dimension_semantics<arbitrary>], iteration_bounds = array<i64: 1, 1, 1>, scalar_prefetch = 0 : i64, scratch_operands = 0 : i64, tpu.core_type = #tpu.core_type<tc>, window_params = [{transform_indices = @transform_0, window_bounds = array<i64: 8, 256>}, {transform_indices = @transform_1, window_bounds = array<i64: 256, 256>}, {transform_indices = @transform_2, window_bounds = array<i64: 1, 256>}, {transform_indices = @transform_3, window_bounds = array<i64: 8, 256>}]} {
    %c0_i32 = arith.constant 0 : i32
    %0 = arith.cmpi eq, %arg2, %c0_i32 : i32
    %1 = arith.extui %0 : i1 to i32
    %c0_i32_0 = arith.constant 0 : i32
    %2 = arith.cmpi ne, %1, %c0_i32_0 : i32
    scf.if %2 {
      %c0_8 = arith.constant 0 : index
      %c0_9 = arith.constant 0 : index
      %9 = vector.load %arg5[%c0_8, %c0_9] : memref<1x256xf32, #tpu.memory_space<vmem>>, vector<1x256xf32>
      %10 = vector.shape_cast %9 : vector<1x256xf32> to vector<1x256xf32>
      %11 = vector.broadcast %10 : vector<1x256xf32> to vector<8x256xf32>
      %c0_10 = arith.constant 0 : index
      %c0_11 = arith.constant 0 : index
      %12 = vector.load %arg6[%c0_10, %c0_11] : memref<8x256xf32, #tpu.memory_space<vmem>>, vector<8x256xf32>
      tpu.vector_store %arg6[%c0_10, %c0_11], %11 {strides = array<i32>} : memref<8x256xf32, #tpu.memory_space<vmem>>, vector<8x256xf32>,
    } else {
    }
    %c0 = arith.constant 0 : index
    %c0_1 = arith.constant 0 : index
    %3 = vector.load %arg6[%c0, %c0_1] : memref<8x256xf32, #tpu.memory_space<vmem>>, vector<8x256xf32>
    %c0_2 = arith.constant 0 : index
    %c0_3 = arith.constant 0 : index
    %4 = vector.load %arg3[%c0_2, %c0_3] : memref<8x256xf32, #tpu.memory_space<vmem>>, vector<8x256xf32>
    %c0_4 = arith.constant 0 : index
    %c0_5 = arith.constant 0 : index
    %5 = vector.load %arg4[%c0_4, %c0_5] : memref<256x256xf32, #tpu.memory_space<vmem>>, vector<256x256xf32>
    %cst = arith.constant dense<0.000000e+00> : vector<8x256xf32>
    %6 = tpu.matmul %4, %5, %cst {dimension_numbers = #tpu.dot_dimension_numbers<[1], [1], [0], [0], [0, 0, 1, 0], [], []>} : vector<8x256xf32>, vector<256x256xf32>, vector<8x256xf32> -> vector<8x256xf32>
    %7 = arith.addf %3, %6 : vector<8x256xf32>
    %c0_6 = arith.constant 0 : index
    %c0_7 = arith.constant 0 : index
    %8 = vector.load %arg6[%c0_6, %c0_7] : memref<8x256xf32, #tpu.memory_space<vmem>>, vector<8x256xf32>
    tpu.vector_store %arg6[%c0_6, %c0_7], %7 {strides = array<i32>} : memref<8x256xf32, #tpu.memory_space<vmem>>, vector<8x256xf32>,
    return
  }
  func.func @transform_0(%arg0: i32, %arg1: i32, %arg2: i32) -> (i32, i32) {
    %c0_i32 = arith.constant 0 : i32
    return %arg0, %arg2 : i32, i32
  }
  func.func @transform_1(%arg0: i32, %arg1: i32, %arg2: i32) -> (i32, i32) {
    %c0_i32 = arith.constant 0 : i32
    return %arg1, %arg2 : i32, i32
  }
  func.func @transform_2(%arg0: i32, %arg1: i32, %arg2: i32) -> (i32, i32) {
    %c0_i32 = arith.constant 0 : i32
    %c0_i32_0 = arith.constant 0 : i32
    return %c0_i32, %arg1 : i32, i32
  }
  func.func @transform_3(%arg0: i32, %arg1: i32, %arg2: i32) -> (i32, i32) {
    %c0_i32 = arith.constant 0 : i32
    return %arg0, %arg1 : i32, i32
  }
}

</mosaic_0001>

<llo_original>
// kernel: my_linear.1
$region0: #{my_linear.1}
  #allocation0 [shape = 'u32[]', space=smem, size = 0x4, offset = 0x4, fixed_abs, tag = 'smem constant byte address 0x4 - core index']
  #allocation1 [shape = 'u32[144,128]{1,0:T(1,128)}', space=vmem, size = 0x12000, scoped, tag = 'internal scratch']
  %s0 = inlined_call_operand.vmem [shape: f32[8,256], index: 0, kind: input, shape index: {}]
  %s1 = inlined_call_operand.vmem [shape: f32[256,256], index: 1, kind: input, shape index: {}]
  %s2 = inlined_call_operand.vmem [shape: f32[1,256], index: 2, kind: input, shape index: {}]
  %s3 = inlined_call_operand.vmem [shape: f32[8,256], index: 3, kind: output, shape index: {}]
  %s4 = sld [smem:[#allocation0]]
  $region26: #{my_linear.1} parent=0
    _
  %s6 = ssub.s32 1, %s4
  %s7 = scalar_select 0, %s6, %s4
  // Predicated region
  $region2: #{my_linear.1} parent=0 // pred_check
    _
  $region3: #{my_linear.1} parent=0 // pred_check_branch
    %9 = sbr.rel (0) target = $region5
  $region4: #{my_linear.1} parent=0 // pred_region
    _
  $region5: #{my_linear.1} parent=0 // pred_fallthru
    _
  // Predicated region
  $region6: #{my_linear.1} parent=0 // pred_check
    _
  $region7: #{my_linear.1} parent=0 // pred_check_branch
    %11 = sbr.rel (0) target = $region9
  $region8: #{my_linear.1} parent=0 // pred_region
    _
  $region9: #{my_linear.1} parent=0 // pred_fallthru
    _
  // Predicated region
  $region10: #{my_linear.1} parent=0 // pred_check
    _
  $region11: #{my_linear.1} parent=0 // pred_check_branch
    %13 = sbr.rel (0) target = $region13
  $region12: #{my_linear.1} parent=0 // pred_region
    _
  $region13: #{my_linear.1} parent=0 // pred_fallthru
    _
  %p14 = scmp.eq.s32.totalorder 0, 0
  // Predicated region
  $region14: #{my_linear.1} parent=0 // pred_check
    %p15 = pneg %p14
  $region15: #{my_linear.1} parent=0 // pred_check_branch
    %17 = sbr.rel (%p15) target = $region17
  $region16: #{my_linear.1} parent=0 // pred_region
    %v18 = vld [vmem:[%s2] sm:$0x3]
    %v20 = vlaneseq
    %v21 = vshrl.u32 %v20, 7
    %v22 = vsub.s32 0, %v21
    %v23 = vrot.slane %v18, %v22
    %v24 = vlaneseq
    %v25 = vshrl.u32 %v24, 7
    %v26 = vsub.s32 1, %v25
    %v27 = vrot.slane %v18, %v26
    %30 = vst [vmem:[%s3] sm:$0xff] %v23
    %31 = vst [vmem:[%s3 + $0x8] sm:$0xff] %v27
  $region17: #{my_linear.1} parent=0 // pred_fallthru
    _
  %v32 = vld [vmem:[%s3] sm:$0xff]
  %v33 = vld [vmem:[%s3 + $0x8] sm:$0xff]
  %v34 = vld [vmem:[%s0] sm:$0xff]
  %v35 = vld [vmem:[%s0 + $0x8] sm:$0xff]
  %v36 = vld [vmem:[%s1] sm:$0xff]
  %v37 = vld [vmem:[%s1 + $0x8] sm:$0xff]
  %v38 = vld [vmem:[%s1 + $0x10] sm:$0xff]
  %v39 = vld [vmem:[%s1 + $0x18] sm:$0xff]
  %v40 = vld [vmem:[%s1 + $0x20] sm:$0xff]
  %v41 = vld [vmem:[%s1 + $0x28] sm:$0xff]
  %v42 = vld [vmem:[%s1 + $0x30] sm:$0xff]
  %v43 = vld [vmem:[%s1 + $0x38] sm:$0xff]
  %v44 = vld [vmem:[%s1 + $0x40] sm:$0xff]
  %v45 = vld [vmem:[%s1 + $0x48] sm:$0xff]
  %v46 = vld [vmem:[%s1 + $0x50] sm:$0xff]
  %v47 = vld [vmem:[%s1 + $0x58] sm:$0xff]
  %v48 = vld [vmem:[%s1 + $0x60] sm:$0xff]
  %v49 = vld [vmem:[%s1 + $0x68] sm:$0xff]
  %v50 = vld [vmem:[%s1 + $0x70] sm:$0xff]
  %v51 = vld [vmem:[%s1 + $0x78] sm:$0xff]
  %v52 = vld [vmem:[%s1 + $0x80] sm:$0xff]
  %v53 = vld [vmem:[%s1 + $0x88] sm:$0xff]
  %v54 = vld [vmem:[%s1 + $0x90] sm:$0xff]
  %v55 = vld [vmem:[%s1 + $0x98] sm:$0xff]
  %v56 = vld [vmem:[%s1 + $0xa0] sm:$0xff]
  %v57 = vld [vmem:[%s1 + $0xa8] sm:$0xff]
  %v58 = vld [vmem:[%s1 + $0xb0] sm:$0xff]
  %v59 = vld [vmem:[%s1 + $0xb8] sm:$0xff]
  %v60 = vld [vmem:[%s1 + $0xc0] sm:$0xff]
  %v61 = vld [vmem:[%s1 + $0xc8] sm:$0xff]
  %v62 = vld [vmem:[%s1 + $0xd0] sm:$0xff]
  %v63 = vld [vmem:[%s1 + $0xd8] sm:$0xff]
  %v64 = vld [vmem:[%s1 + $0xe0] sm:$0xff]
  %v65 = vld [vmem:[%s1 + $0xe8] sm:$0xff]
  %v66 = vld [vmem:[%s1 + $0xf0] sm:$0xff]
  %v67 = vld [vmem:[%s1 + $0xf8] sm:$0xff]
  %v68 = vld [vmem:[%s1 + $0x100] sm:$0xff]
  %v69 = vld [vmem:[%s1 + $0x108] sm:$0xff]
  %v70 = vld [vmem:[%s1 + $0x110] sm:$0xff]
  %v71 = vld [vmem:[%s1 + $0x118] sm:$0xff]
  %v72 = vld [vmem:[%s1 + $0x120] sm:$0xff]
  %v73 = vld [vmem:[%s1 + $0x128] sm:$0xff]
  %v74 = vld [vmem:[%s1 + $0x130] sm:$0xff]
  %v75 = vld [vmem:[%s1 + $0x138] sm:$0xff]
  %v76 = vld [vmem:[%s1 + $0x140] sm:$0xff]
  %v77 = vld [vmem:[%s1 + $0x148] sm:$0xff]
  %v78 = vld [vmem:[%s1 + $0x150] sm:$0xff]
  %v79 = vld [vmem:[%s1 + $0x158] sm:$0xff]
  %v80 = vld [vmem:[%s1 + $0x160] sm:$0xff]
  %v81 = vld [vmem:[%s1 + $0x168] sm:$0xff]
  %v82 = vld [vmem:[%s1 + $0x170] sm:$0xff]
  %v83 = vld [vmem:[%s1 + $0x178] sm:$0xff]
  %v84 = vld [vmem:[%s1 + $0x180] sm:$0xff]
  %v85 = vld [vmem:[%s1 + $0x188] sm:$0xff]
  %v86 = vld [vmem:[%s1 + $0x190] sm:$0xff]
  %v87 = vld [vmem:[%s1 + $0x198] sm:$0xff]
  %v88 = vld [vmem:[%s1 + $0x1a0] sm:$0xff]
  %v89 = vld [vmem:[%s1 + $0x1a8] sm:$0xff]
  %v90 = vld [vmem:[%s1 + $0x1b0] sm:$0xff]
  %v91 = vld [vmem:[%s1 + $0x1b8] sm:$0xff]
  %v92 = vld [vmem:[%s1 + $0x1c0] sm:$0xff]
  %v93 = vld [vmem:[%s1 + $0x1c8] sm:$0xff]
  %v94 = vld [vmem:[%s1 + $0x1d0] sm:$0xff]
  %v95 = vld [vmem:[%s1 + $0x1d8] sm:$0xff]
  %v96 = vld [vmem:[%s1 + $0x1e0] sm:$0xff]
  %v97 = vld [vmem:[%s1 + $0x1e8] sm:$0xff]
  %v98 = vld [vmem:[%s1 + $0x1f0] sm:$0xff]
  %v99 = vld [vmem:[%s1 + $0x1f8] sm:$0xff]
  %100 = vmatprep.subr.mxu0 %v37
  %101 = vmatpush1.xpose.msra.mxu0 %v36
  %102 = vmatprep.subr.mxu0 %v39
  %103 = vmatpush1.xpose.msra.mxu0 %v38
  %104 = vmatprep.subr.mxu0 %v41
  %105 = vmatpush1.xpose.msra.mxu0 %v40
  %106 = vmatprep.subr.mxu0 %v43
  %107 = vmatpush1.xpose.msra.mxu0 %v42
  %108 = vmatprep.subr.mxu0 %v45
  %109 = vmatpush1.xpose.msra.mxu0 %v44
  %110 = vmatprep.subr.mxu0 %v47
  %111 = vmatpush1.xpose.msra.mxu0 %v46
  %112 = vmatprep.subr.mxu0 %v49
  %113 = vmatpush1.xpose.msra.mxu0 %v48
  %114 = vmatprep.subr.mxu0 %v51
  %115 = vmatpush1.xpose.msra.mxu0 %v50
  %116 = vmatprep.subr.mxu0 %v53
  %117 = vmatpush1.xpose.msra.mxu0 %v52
  %118 = vmatprep.subr.mxu0 %v55
  %119 = vmatpush1.xpose.msra.mxu0 %v54
  %120 = vmatprep.subr.mxu0 %v57
  %121 = vmatpush1.xpose.msra.mxu0 %v56
  %122 = vmatprep.subr.mxu0 %v59
  %123 = vmatpush1.xpose.msra.mxu0 %v58
  %124 = vmatprep.subr.mxu0 %v61
  %125 = vmatpush1.xpose.msra.mxu0 %v60
  %126 = vmatprep.subr.mxu0 %v63
  %127 = vmatpush1.xpose.msra.mxu0 %v62
  %128 = vmatprep.subr.mxu0 %v65
  %129 = vmatpush1.xpose.msra.mxu0 %v64
  %130 = vmatprep.subr.mxu0 %v67
  %131 = vmatpush1.xpose.msra.mxu0 %v66
  %132 = vmatprep.subr.mxu0 %v69
  %133 = vmatpush1.xpose.msra.mxu0 %v68
  %134 = vmatprep.subr.mxu0 %v71
  %135 = vmatpush1.xpose.msra.mxu0 %v70
  %136 = vmatprep.subr.mxu0 %v73
  %137 = vmatpush1.xpose.msra.mxu0 %v72
  %138 = vmatprep.subr.mxu0 %v75
  %139 = vmatpush1.xpose.msra.mxu0 %v74
  %140 = vmatprep.subr.mxu0 %v77
  %141 = vmatpush1.xpose.msra.mxu0 %v76
  %142 = vmatprep.subr.mxu0 %v79
  %143 = vmatpush1.xpose.msra.mxu0 %v78
  %144 = vmatprep.subr.mxu0 %v81
  %145 = vmatpush1.xpose.msra.mxu0 %v80
  %146 = vmatprep.subr.mxu0 %v83
  %147 = vmatpush1.xpose.msra.mxu0 %v82
  %148 = vmatprep.subr.mxu0 %v85
  %149 = vmatpush1.xpose.msra.mxu0 %v84
  %150 = vmatprep.subr.mxu0 %v87
  %151 = vmatpush1.xpose.msra.mxu0 %v86
  %152 = vmatprep.subr.mxu0 %v89
  %153 = vmatpush1.xpose.msra.mxu0 %v88
  %154 = vmatprep.subr.mxu0 %v91
  %155 = vmatpush1.xpose.msra.mxu0 %v90
  %156 = vmatprep.subr.mxu0 %v93
  %157 = vmatpush1.xpose.msra.mxu0 %v92
  %158 = vmatprep.subr.mxu0 %v95
  %159 = vmatpush1.xpose.msra.mxu0 %v94
  %160 = vmatprep.subr.mxu0 %v97
  %161 = vmatpush1.xpose.msra.mxu0 %v96
  %162 = vmatprep.subr.mxu0 %v99
  %163 = vmatpush1.xpose.msra.mxu0 %v98
  %164 = vmatprep.mubr.f32.mxu0 %v35
  %165 = vmatmul.mubr.f32.gmra.mrb[0].mxu0 %v34
  %v166 = vpop.f32.mrb[0].mxu0
  %v167 = vadd.f32 0.0, %v166
  %v168 = vpop.f32.mrb[0].mxu0
  %v169 = vadd.f32 0.0, %v168
  %170 = vdwg.mxu0
  %v171 = vadd.f32 %v32, %v167
  %v172 = vadd.f32 %v33, %v169
  %173 = vst [vmem:[%s3] sm:$0xff] %v171
  %174 = vst [vmem:[%s3 + $0x8] sm:$0xff] %v172
  // Predicated region
  $region18: #{my_linear.1} parent=0 // pred_check
    _
  $region19: #{my_linear.1} parent=0 // pred_check_branch
    %176 = sbr.rel (0) target = $region21
  $region20: #{my_linear.1} parent=0 // pred_region
    _
  $region21: #{my_linear.1} parent=0 // pred_fallthru
    _
  // Predicated region
  $region22: #{my_linear.1} parent=0 // pred_check
    _
  $region23: #{my_linear.1} parent=0 // pred_check_branch
    %178 = sbr.rel (0) target = $region25
  $region24: #{my_linear.1} parent=0 // pred_region
    _
  $region25: #{my_linear.1} parent=0 // pred_fallthru
    _

</llo_original>
